<compile_context>
chip_gen: v5e
topology: v5e:2x2
jax: 0.10.0
libtpu: 0.0.40
codegen_flags: <defaults>
</compile_context>

<pallas_src>
import jax
import jax.numpy as jnp
from jax.experimental import pallas as pl
from jax.experimental.pallas import tpu as pltpu

D = 1024  # hidden size hardwired by nn.Linear(1024, .) and nn.Bilinear(1024, 1024, 1)


def _round_up(x, m):
    return ((x + m - 1) // m) * m


# ---------------------------------------------------------------------------
# Pallas kernels
# ---------------------------------------------------------------------------

def _shift_linear_kernel(x_ref, w_ref, b_ref, o_ref):
    # [bz, D]bf16 @ [D, C_pad]bf16 -> f32, + bias   (shift_task_linear_layer)
    o_ref[...] = (
        jnp.dot(x_ref[...], w_ref[...], preferred_element_type=jnp.float32)
        + b_ref[...]
    )


def shift_linear(x, w, b):
    """x: [bz, D], w: [D, C], b: [C]  ->  logits [bz, C] f32."""
    bz = x.shape[0]
    c = w.shape[1]
    c_pad = _round_up(c, 128)  # lane-dense output store (no masked vst)
    w_p = jnp.pad(w.astype(jnp.bfloat16), ((0, 0), (0, c_pad - c)))
    b_p = jnp.pad(b.astype(jnp.float32).reshape(1, c), ((0, 0), (0, c_pad - c)))
    out = pl.pallas_call(
        _shift_linear_kernel,
        out_shape=jax.ShapeDtypeStruct((bz, c_pad), jnp.float32),
        in_specs=[pl.BlockSpec(memory_space=pltpu.MemorySpace.VMEM)] * 3,
        out_specs=pl.BlockSpec(memory_space=pltpu.MemorySpace.VMEM),
    )(x.astype(jnp.bfloat16), w_p, b_p)
    return out[:, :c]


def _mean_pool_kernel(x_ref, len_ref, o_ref):
    # Masked mean over tokens: out[r] = mean(x[r, :len[r], :], axis=0)
    x = x_ref[...].astype(jnp.float32)                     # [R, T, D] (bf16 in)
    lens = jnp.maximum(len_ref[...], 1)                    # [R, 1] (guard len==0)
    tok = jax.lax.broadcasted_iota(jnp.int32, (x.shape[0], x.shape[1], 1), 1)
    mask = (tok < lens[:, :, None]).astype(jnp.float32)    # [R, T, 1] (no 3-D iota)
    s = jnp.sum(x * mask, axis=1)                          # [R, D] f32 accumulate
    inv = 1.0 / lens.astype(jnp.float32)                   # one divide per row
    o_ref[...] = s * inv


def mean_pool(x, lens, r_tile=32):
    """x: [R, T, D] bf16, lens: [R] int  ->  [R, D] f32 masked mean over tokens."""
    r, t, _ = x.shape
    r_tile = min(r_tile, _round_up(r, 8))
    r_pad = _round_up(r, r_tile)
    if r_pad != r:
        x = jnp.pad(x, ((0, r_pad - r), (0, 0), (0, 0)))
        lens = jnp.pad(lens, (0, r_pad - r))
    lens2 = lens.reshape(r_pad, 1).astype(jnp.int32)
    out = pl.pallas_call(
        _mean_pool_kernel,
        out_shape=jax.ShapeDtypeStruct((r_pad, D), jnp.float32),
        grid=(r_pad // r_tile,),
        in_specs=[
            pl.BlockSpec((r_tile, t, D), lambda i: (i, 0, 0)),
            pl.BlockSpec((r_tile, 1), lambda i: (i, 0)),
        ],
        out_specs=pl.BlockSpec((r_tile, D), lambda i: (i, 0)),
        compiler_params=pltpu.CompilerParams(
            dimension_semantics=("parallel",),
            vmem_limit_bytes=32 * 1024 * 1024,
        ),
    )(x, lens2)
    return out[:r]


def _tw_matmul_kernel(x_ref, w_ref, o_ref):
    # Single MXU matmul for the deduplicated bilinear LHS: t = target @ W.
    o_ref[...] = jnp.dot(x_ref[...], w_ref[...], preferred_element_type=jnp.float32)


def target_times_w(target, w):
    """target: [N, D], w: [D, D]  ->  [N_pad, D] f32 (padded rows are zero)."""
    n = target.shape[0]
    n_pad = _round_up(n, 8)
    tgt = jnp.pad(target.astype(jnp.bfloat16), ((0, n_pad - n), (0, 0)))
    return pl.pallas_call(
        _tw_matmul_kernel,
        out_shape=jax.ShapeDtypeStruct((n_pad, D), jnp.float32),
        in_specs=[pl.BlockSpec(memory_space=pltpu.MemorySpace.VMEM)] * 2,
        out_specs=pl.BlockSpec(memory_space=pltpu.MemorySpace.VMEM),
    )(tgt, w.astype(jnp.bfloat16))


def _rowdot_kernel(t_ref, x2_ref, o_ref):
    # y[m, n] = sum_d t[n, d] * x2[m, n, d]  -> lane-dense [M_tile, N] output.
    t = t_ref[...]                                   # [N, D]    f32
    x2 = x2_ref[...].astype(jnp.float32)             # [Mt, N, D] (bf16 in)
    o_ref[...] = jnp.sum(x2 * t[None, :, :], axis=-1)


def disc_rowdot(t, x2, m_tile=8):
    """t: [N_pad, D] f32, x2: [M, N_pad, D] bf16  ->  [M, N_pad] f32 raw scores."""
    m, n_pad, _ = x2.shape
    m_pad = _round_up(m, m_tile)
    if m_pad != m:
        x2 = jnp.pad(x2, ((0, m_pad - m), (0, 0), (0, 0)))
    out = pl.pallas_call(
        _rowdot_kernel,
        out_shape=jax.ShapeDtypeStruct((m_pad, n_pad), jnp.float32),
        grid=(m_pad // m_tile,),
        in_specs=[
            pl.BlockSpec((n_pad, D), lambda i: (0, 0)),
            pl.BlockSpec((m_tile, n_pad, D), lambda i: (i, 0, 0)),
        ],
        out_specs=pl.BlockSpec((m_tile, n_pad), lambda i: (i, 0)),
        compiler_params=pltpu.CompilerParams(
            dimension_semantics=("parallel",),
            vmem_limit_bytes=32 * 1024 * 1024,
        ),
    )(t, x2)
    return out[:m]


# ---------------------------------------------------------------------------
# Plain-JAX glue (gathers, losses) reproducing My_Model.forward semantics
# ---------------------------------------------------------------------------

def cross_entropy_loss(logits, labels):
    logz = jax.nn.logsumexp(logits, axis=-1)
    ll = jnp.take_along_axis(logits, labels[:, None], axis=-1)[:, 0]
    return jnp.mean(logz - ll)


def my_model_forward(params, data_item, args):
    sent = data_item["sent"]                       # [bz, col_num, cell_len] token ids
    bz, col_num, cell_len = sent.shape

    # TODO(synk): the external pretrained sentence_encoder (transformer) and
    # tokenizer are not part of this module; its last_hidden_state is an input.
    sent_embed = data_item["sent_embed"]           # [bz, col_num*cell_len, D]

    # ---------------- shift task ('1') ----------------
    cls_embed = sent_embed[:, 0, :]                # [bz, D]
    logits = shift_linear(cls_embed, params["shift_w"], params["shift_b"])
    shift_res = jnp.argmax(logits, axis=-1)
    shift_loss = cross_entropy_loss(logits, data_item["shift_label"])

    # ---------------- discriminator task ('2') ----------------
    ncols = col_num - 2
    se = sent_embed.reshape(bz, col_num, cell_len, D)[:, 1:-1, :, :]   # [bz, ncols, T, D]
    lens = data_item["input_len_list"].astype(jnp.int32)               # [bz, ncols]
    pooled = mean_pool(
        se.reshape(bz * ncols, cell_len, D).astype(jnp.bfloat16),
        lens.reshape(bz * ncols),
    ).reshape(bz, ncols, D)                                            # f32

    disc_label = data_item["discriminator_input_index"]                # [bz, K]
    k_pos = disc_label.shape[1]
    p_cols = ncols - 1

    # The K*bz unique bilinear LHS rows (deduplicated: no broadcast/concat).
    target = pooled[jnp.arange(bz)[:, None], disc_label]               # [bz, K, D]
    target = jnp.transpose(target, (1, 0, 2)).reshape(k_pos * bz, D)   # [K*bz, D]

    # Candidate ("x2") columns: all columns except the labeled one (order kept).
    j = jnp.arange(p_cols)
    pos_idx = jnp.where(j[None, None, :] < disc_label[:, :, None],
                        j[None, None, :], j[None, None, :] + 1)        # [bz, K, P]
    pos_idx = jnp.transpose(pos_idx, (1, 0, 2))                        # [K, bz, P]

    # TODO(synk): reference uses random.randint(1, bz-1); fixed shift=1 here
    # for determinism.
    mismatch_rows = (jnp.arange(bz) + 1) % bz

    pos_embed = pooled[jnp.arange(bz)[None, :, None], pos_idx]         # [K, bz, P, D]
    neg_embed = pooled[mismatch_rows[None, :, None], pos_idx]          # [K, bz, P, D]
    x2 = jnp.stack([pos_embed, neg_embed], axis=0)                     # [2, K, bz, P, D]
    x2 = jnp.transpose(x2, (0, 3, 1, 2, 4)).reshape(
        2 * p_cols, k_pos * bz, D)                                     # [2P, K*bz, D]

    # Dedup'd bilinear head: one matmul t = target @ W, then row-wise dots.
    n = k_pos * bz
    t = target_times_w(target, params["disc_w"])                       # [n_pad, D]
    n_pad = t.shape[0]
    if n_pad != n:
        x2 = jnp.pad(x2, ((0, 0), (0, n_pad - n), (0, 0)))
    y = disc_rowdot(t, x2.astype(jnp.bfloat16))                        # [2P, n_pad]
    disc_logits = y[:, :n] + params["disc_b"][0]                       # [2P, K*bz]
    disc_logits = disc_logits.reshape(2, p_cols, k_pos, bz, 1)

    pos_logit = disc_logits[0]                                         # [P, K, bz, 1]
    neg_logit = disc_logits[1]
    pos_out = jax.nn.sigmoid(pos_logit)
    neg_out = jax.nn.sigmoid(neg_logit)

    # BCE(sigmoid(z), 1) / BCE(sigmoid(z), 0), computed stably in logit space.
    bce_pos = -jnp.mean(jax.nn.log_sigmoid(pos_logit))
    bce_neg = -jnp.mean(jax.nn.log_sigmoid(-neg_logit))
    disc_loss = (bce_pos + bce_neg) / 2.0

    disc_loss = args["discriminator_loss_weight"] * disc_loss
    shift_loss = args["shift_loss_weight"] * shift_loss
    loss = disc_loss + shift_loss
    return loss, shift_res, shift_loss, (pos_out, neg_out), disc_loss


# ---------------------------------------------------------------------------
# Demo
# ---------------------------------------------------------------------------

if __name__ == "__main__":
    bz, col_num, cell_len = 2, 6, 8
    n_disc = 2  # number of discriminator positions per example
    args = dict(shift=3, shift_loss_weight=1.0, discriminator_loss_weight=1.0)
    num_classes = args["shift"] + 1

    keys = iter(jax.random.split(jax.random.PRNGKey(0), 10))
    params = {
        "shift_w": 0.02 * jax.random.normal(next(keys), (D, num_classes), jnp.float32),
        "shift_b": jnp.zeros((num_classes,), jnp.float32),
        "disc_w": 0.02 * jax.random.normal(next(keys), (D, D), jnp.float32),
        "disc_b": jnp.zeros((1,), jnp.float32),
    }

    sent = jax.random.randint(next(keys), (bz, col_num, cell_len), 0, 100, jnp.int32)
    sent_embed = jax.random.normal(next(keys), (bz, col_num * cell_len, D), jnp.float32)
    shift_label = jax.random.randint(next(keys), (bz,), 0, num_classes, jnp.int32)
    input_len_list = jax.random.randint(
        next(keys), (bz, col_num - 2), 1, cell_len + 1, jnp.int32
    )
    disc_idx = jax.random.randint(next(keys), (bz, n_disc), 0, col_num - 2, jnp.int32)

    data_item = dict(
        sent=sent,
        sent_embed=sent_embed,
        shift_label=shift_label,
        input_len_list=input_len_list,
        discriminator_input_index=disc_idx,
    )

    out = my_model_forward(params, data_item, args)
    jax.block_until_ready(out)
    loss, shift_res, shift_loss, (pos_out, neg_out), disc_loss = out
    assert loss.shape == ()
    assert shift_res.shape == (bz,)
    assert pos_out.shape == (col_num - 3, n_disc, bz, 1)
    assert neg_out.shape == (col_num - 3, n_disc, bz, 1)
    assert bool(jnp.isfinite(loss))
    print("KERNEL_OK")
</pallas_src>

<mosaic_0001>
module attributes {stable_mosaic.version = 11 : i64} {
  func.func @_shift_linear_kernel(%arg0: memref<2x1024xbf16, #tpu.memory_space<vmem>>, %arg1: memref<1024x128xbf16, #tpu.memory_space<vmem>>, %arg2: memref<1x128xf32, #tpu.memory_space<vmem>>, %arg3: memref<2x128xf32, #tpu.memory_space<vmem>>) attributes {dimension_semantics = [], scalar_prefetch = 0 : i64, scratch_operands = 0 : i64, tpu.core_type = #tpu.core_type<tc>} {
    %c0 = arith.constant 0 : index
    %c0_0 = arith.constant 0 : index
    %0 = vector.load %arg0[%c0, %c0_0] : memref<2x1024xbf16, #tpu.memory_space<vmem>>, vector<2x1024xbf16>
    %c0_1 = arith.constant 0 : index
    %c0_2 = arith.constant 0 : index
    %1 = vector.load %arg1[%c0_1, %c0_2] : memref<1024x128xbf16, #tpu.memory_space<vmem>>, vector<1024x128xbf16>
    %cst = arith.constant dense<0.000000e+00> : vector<2x128xf32>
    %2 = tpu.matmul %0, %1, %cst {dimension_numbers = #tpu.dot_dimension_numbers<[1], [0], [0], [1], [0, 0, 1, 1], [], []>} : vector<2x1024xbf16>, vector<1024x128xbf16>, vector<2x128xf32> -> vector<2x128xf32>
    %c0_3 = arith.constant 0 : index
    %c0_4 = arith.constant 0 : index
    %3 = vector.load %arg2[%c0_3, %c0_4] : memref<1x128xf32, #tpu.memory_space<vmem>>, vector<1x128xf32>
    %4 = vector.broadcast %3 : vector<1x128xf32> to vector<2x128xf32>
    %5 = arith.addf %2, %4 : vector<2x128xf32>
    %c0_5 = arith.constant 0 : index
    %c0_6 = arith.constant 0 : index
    %6 = vector.load %arg3[%c0_5, %c0_6] : memref<2x128xf32, #tpu.memory_space<vmem>>, vector<2x128xf32>
    tpu.vector_store %arg3[%c0_5, %c0_6], %5 {strides = array<i32>} : memref<2x128xf32, #tpu.memory_space<vmem>>, vector<2x128xf32>,
    return
  }
}

</mosaic_0001>

<llo_original>
// kernel: tpu_custom_call.1
$region0: #{tpu_custom_call.1}
  #allocation0 [shape = 'u32[]', space=smem, size = 0x4, offset = 0x4, fixed_abs, tag = 'smem constant byte address 0x4 - core index']
  #allocation1 [shape = 'u32[72,128]{1,0:T(1,128)}', space=vmem, size = 0x9000, scoped, tag = 'internal scratch']
  %s0 = inlined_call_operand.hbm [shape: bf16[2,1024], index: 0, kind: input, shape index: {}]
  %s1 = inlined_call_operand.hbm [shape: bf16[1024,128], index: 1, kind: input, shape index: {}]
  %s2 = inlined_call_operand.vmem [shape: f32[1,128], index: 2, kind: input, shape index: {}]
  %s3 = inlined_call_operand.hbm [shape: f32[2,128], index: 3, kind: output, shape index: {}]
  %s4 = sld [smem:[#allocation0]]
  $region30: #{tpu_custom_call.1} parent=0
    _
  %s6 = ssub.s32 1, %s4
  %s7 = scalar_select 0, %s6, %s4
  $region1: #{tpu_custom_call.1} parent=0
    #allocation2 [shape = 'u8[4096]{0}', space=vmem, size = 0x1000, scoped, tag = 'input window, operand 0, single buffered']
    #allocation3 [shape = 's32[1]{0}', space=sflag, size = 0x4, scoped, tag = 'scoped memory for tpu_custom_call.1']
    #allocation4 [shape = 's32[1]{0}', space=sflag, size = 0x4, scoped, tag = 'scoped memory for tpu_custom_call.1']
    #allocation5 [shape = 'u8[262144]{0}', space=vmem, size = 0x40000, scoped, tag = 'input window, operand 1, single buffered']
    #allocation6 [shape = 's32[1]{0}', space=sflag, size = 0x4, scoped, tag = 'scoped memory for tpu_custom_call.1']
    #allocation7 [shape = 'u8[1024]{0}', space=vmem, size = 0x400, scoped, tag = 'output window, operand 0, single buffered']
    %8 = vsyncpa [#allocation3], 0
    %9 = vsyncpa [#allocation6], 0
    %10 = vsyncpa [#allocation4], 0
    // Predicated region
    $region2: #{tpu_custom_call.1} parent=1 // pred_check
      _
    $region3: #{tpu_custom_call.1} parent=1 // pred_check_branch
      %12 = sbr.rel (0) target = $region5
    $region4: #{tpu_custom_call.1} parent=1 // pred_region
      %14 = vsyncadd [#allocation3], 0
      %s16 = sshll.u32 %s0, 4
      %s17 = int_to_ptr.hbm [resolvable:$true] %s16
      %s18 = sshll.u32 [#allocation2], 4
      %s19 = int_to_ptr.vmem [resolvable:$true] %s18
      %21 = dma.hbm_to_vmem [thread:$0]  %s17, 128, %s19, [#allocation3]
    $region5: #{tpu_custom_call.1} parent=1 // pred_fallthru
      _
    // Predicated region
    $region6: #{tpu_custom_call.1} parent=1 // pred_check
      _
    $region7: #{tpu_custom_call.1} parent=1 // pred_check_branch
      %23 = sbr.rel (0) target = $region9
    $region8: #{tpu_custom_call.1} parent=1 // pred_region
      %25 = vsyncadd [#allocation6], 0
      %s26 = sshll.u32 %s1, 4
      %s27 = int_to_ptr.hbm [resolvable:$true] %s26
      %s28 = sshll.u32 [#allocation5], 4
      %s29 = int_to_ptr.vmem [resolvable:$true] %s28
      %34 = dma.hbm_to_vmem [thread:$0]  %s27, 8192, %s29, [#allocation6], 64, 64, 4
    $region9: #{tpu_custom_call.1} parent=1 // pred_fallthru
      _
    // Predicated region
    $region10: #{tpu_custom_call.1} parent=1 // pred_check
      _
    $region11: #{tpu_custom_call.1} parent=1 // pred_check_branch
      %36 = sbr.rel (0) target = $region13
    $region12: #{tpu_custom_call.1} parent=1 // pred_region
      _
    $region13: #{tpu_custom_call.1} parent=1 // pred_fallthru
      _
    // Predicated region
    $region14: #{tpu_custom_call.1} parent=1 // pred_check
      _
    $region15: #{tpu_custom_call.1} parent=1 // pred_check_branch
      %38 = sbr.rel (0) target = $region17
    $region16: #{tpu_custom_call.1} parent=1 // pred_region
      %40 = dma.done [#allocation3], 128
    $region17: #{tpu_custom_call.1} parent=1 // pred_fallthru
      _
    // Predicated region
    $region18: #{tpu_custom_call.1} parent=1 // pred_check
      _
    $region19: #{tpu_custom_call.1} parent=1 // pred_check_branch
      %42 = sbr.rel (0) target = $region21
    $region20: #{tpu_custom_call.1} parent=1 // pred_region
      %44 = dma.done [#allocation6], 8192
    $region21: #{tpu_custom_call.1} parent=1 // pred_fallthru
      _
    %v45 = vld [vmem:[#allocation2] sm:$0xff]
    %v46 = vld [vmem:[#allocation5] sm:$0xf]
    %v47 = vld [vmem:[#allocation5 + $0x4] sm:$0xf]
    %v48 = vld [vmem:[#allocation5 + $0x8] sm:$0xf]
    %v49 = vld [vmem:[#allocation5 + $0xc] sm:$0xf]
    %v50 = vld [vmem:[#allocation5 + $0x10] sm:$0xf]
    %v51 = vld [vmem:[#allocation5 + $0x14] sm:$0xf]
    %v52 = vld [vmem:[#allocation5 + $0x18] sm:$0xf]
    %v53 = vld [vmem:[#allocation5 + $0x1c] sm:$0xf]
    %v54 = vld [vmem:[#allocation5 + $0x20] sm:$0xf]
    %v55 = vld [vmem:[#allocation5 + $0x24] sm:$0xf]
    %v56 = vld [vmem:[#allocation5 + $0x28] sm:$0xf]
    %v57 = vld [vmem:[#allocation5 + $0x2c] sm:$0xf]
    %v58 = vld [vmem:[#allocation5 + $0x30] sm:$0xf]
    %v59 = vld [vmem:[#allocation5 + $0x34] sm:$0xf]
    %v60 = vld [vmem:[#allocation5 + $0x38] sm:$0xf]
    %v61 = vld [vmem:[#allocation5 + $0x3c] sm:$0xf]
    %v62 = vld [vmem:[#allocation5 + $0x40] sm:$0xf]
    %v63 = vld [vmem:[#allocation5 + $0x44] sm:$0xf]
    %v64 = vld [vmem:[#allocation5 + $0x48] sm:$0xf]
    %v65 = vld [vmem:[#allocation5 + $0x4c] sm:$0xf]
    %v66 = vld [vmem:[#allocation5 + $0x50] sm:$0xf]
    %v67 = vld [vmem:[#allocation5 + $0x54] sm:$0xf]
    %v68 = vld [vmem:[#allocation5 + $0x58] sm:$0xf]
    %v69 = vld [vmem:[#allocation5 + $0x5c] sm:$0xf]
    %v70 = vld [vmem:[#allocation5 + $0x60] sm:$0xf]
    %v71 = vld [vmem:[#allocation5 + $0x64] sm:$0xf]
    %v72 = vld [vmem:[#allocation5 + $0x68] sm:$0xf]
    %v73 = vld [vmem:[#allocation5 + $0x6c] sm:$0xf]
    %v74 = vld [vmem:[#allocation5 + $0x70] sm:$0xf]
    %v75 = vld [vmem:[#allocation5 + $0x74] sm:$0xf]
    %v76 = vld [vmem:[#allocation5 + $0x78] sm:$0xf]
    %v77 = vld [vmem:[#allocation5 + $0x7c] sm:$0xf]
    %v78 = vld [vmem:[#allocation5 + $0x80] sm:$0xf]
    %v79 = vld [vmem:[#allocation5 + $0x84] sm:$0xf]
    %v80 = vld [vmem:[#allocation5 + $0x88] sm:$0xf]
    %v81 = vld [vmem:[#allocation5 + $0x8c] sm:$0xf]
    %v82 = vld [vmem:[#allocation5 + $0x90] sm:$0xf]
    %v83 = vld [vmem:[#allocation5 + $0x94] sm:$0xf]
    %v84 = vld [vmem:[#allocation5 + $0x98] sm:$0xf]
    %v85 = vld [vmem:[#allocation5 + $0x9c] sm:$0xf]
    %v86 = vld [vmem:[#allocation5 + $0xa0] sm:$0xf]
    %v87 = vld [vmem:[#allocation5 + $0xa4] sm:$0xf]
    %v88 = vld [vmem:[#allocation5 + $0xa8] sm:$0xf]
    %v89 = vld [vmem:[#allocation5 + $0xac] sm:$0xf]
    %v90 = vld [vmem:[#allocation5 + $0xb0] sm:$0xf]
    %v91 = vld [vmem:[#allocation5 + $0xb4] sm:$0xf]
    %v92 = vld [vmem:[#allocation5 + $0xb8] sm:$0xf]
    %v93 = vld [vmem:[#allocation5 + $0xbc] sm:$0xf]
    %v94 = vld [vmem:[#allocation5 + $0xc0] sm:$0xf]
    %v95 = vld [vmem:[#allocation5 + $0xc4] sm:$0xf]
    %v96 = vld [vmem:[#allocation5 + $0xc8] sm:$0xf]
    %v97 = vld [vmem:[#allocation5 + $0xcc] sm:$0xf]
    %v98 = vld [vmem:[#allocation5 + $0xd0] sm:$0xf]
    %v99 = vld [vmem:[#allocation5 + $0xd4] sm:$0xf]
    %v100 = vld [vmem:[#allocation5 + $0xd8] sm:$0xf]
    %v101 = vld [vmem:[#allocation5 + $0xdc] sm:$0xf]
    %v102 = vld [vmem:[#allocation5 + $0xe0] sm:$0xf]
    %v103 = vld [vmem:[#allocation5 + $0xe4] sm:$0xf]
    %v104 = vld [vmem:[#allocation5 + $0xe8] sm:$0xf]
    %v105 = vld [vmem:[#allocation5 + $0xec] sm:$0xf]
    %v106 = vld [vmem:[#allocation5 + $0xf0] sm:$0xf]
    %v107 = vld [vmem:[#allocation5 + $0xf4] sm:$0xf]
    %v108 = vld [vmem:[#allocation5 + $0xf8] sm:$0xf]
    %v109 = vld [vmem:[#allocation5 + $0xfc] sm:$0xf]
    %v110 = vld [vmem:[#allocation5 + $0x100] sm:$0xf]
    %v111 = vld [vmem:[#allocation5 + $0x104] sm:$0xf]
    %v112 = vld [vmem:[#allocation5 + $0x108] sm:$0xf]
    %v113 = vld [vmem:[#allocation5 + $0x10c] sm:$0xf]
    %v114 = vld [vmem:[#allocation5 + $0x110] sm:$0xf]
    %v115 = vld [vmem:[#allocation5 + $0x114] sm:$0xf]
    %v116 = vld [vmem:[#allocation5 + $0x118] sm:$0xf]
    %v117 = vld [vmem:[#allocation5 + $0x11c] sm:$0xf]
    %v118 = vld [vmem:[#allocation5 + $0x120] sm:$0xf]
    %v119 = vld [vmem:[#allocation5 + $0x124] sm:$0xf]
    %v120 = vld [vmem:[#allocation5 + $0x128] sm:$0xf]
    %v121 = vld [vmem:[#allocation5 + $0x12c] sm:$0xf]
    %v122 = vld [vmem:[#allocation5 + $0x130] sm:$0xf]
    %v123 = vld [vmem:[#allocation5 + $0x134] sm:$0xf]
    %v124 = vld [vmem:[#allocation5 + $0x138] sm:$0xf]
    %v125 = vld [vmem:[#allocation5 + $0x13c] sm:$0xf]
    %v126 = vld [vmem:[#allocation5 + $0x140] sm:$0xf]
    %v127 = vld [vmem:[#allocation5 + $0x144] sm:$0xf]
    %v128 = vld [vmem:[#allocation5 + $0x148] sm:$0xf]
    %v129 = vld [vmem:[#allocation5 + $0x14c] sm:$0xf]
    %v130 = vld [vmem:[#allocation5 + $0x150] sm:$0xf]
    %v131 = vld [vmem:[#allocation5 + $0x154] sm:$0xf]
    %v132 = vld [vmem:[#allocation5 + $0x158] sm:$0xf]
    %v133 = vld [vmem:[#allocation5 + $0x15c] sm:$0xf]
    %v134 = vld [vmem:[#allocation5 + $0x160] sm:$0xf]
    %v135 = vld [vmem:[#allocation5 + $0x164] sm:$0xf]
    %v136 = vld [vmem:[#allocation5 + $0x168] sm:$0xf]
    %v137 = vld [vmem:[#allocation5 + $0x16c] sm:$0xf]
    %v138 = vld [vmem:[#allocation5 + $0x170] sm:$0xf]
    %v139 = vld [vmem:[#allocation5 + $0x174] sm:$0xf]
    %v140 = vld [vmem:[#allocation5 + $0x178] sm:$0xf]
    %v141 = vld [vmem:[#allocation5 + $0x17c] sm:$0xf]
    %v142 = vld [vmem:[#allocation5 + $0x180] sm:$0xf]
    %v143 = vld [vmem:[#allocation5 + $0x184] sm:$0xf]
    %v144 = vld [vmem:[#allocation5 + $0x188] sm:$0xf]
    %v145 = vld [vmem:[#allocation5 + $0x18c] sm:$0xf]
    %v146 = vld [vmem:[#allocation5 + $0x190] sm:$0xf]
    %v147 = vld [vmem:[#allocation5 + $0x194] sm:$0xf]
    %v148 = vld [vmem:[#allocation5 + $0x198] sm:$0xf]
    %v149 = vld [vmem:[#allocation5 + $0x19c] sm:$0xf]
    %v150 = vld [vmem:[#allocation5 + $0x1a0] sm:$0xf]
    %v151 = vld [vmem:[#allocation5 + $0x1a4] sm:$0xf]
    %v152 = vld [vmem:[#allocation5 + $0x1a8] sm:$0xf]
    %v153 = vld [vmem:[#allocation5 + $0x1ac] sm:$0xf]
    %v154 = vld [vmem:[#allocation5 + $0x1b0] sm:$0xf]
    %v155 = vld [vmem:[#allocation5 + $0x1b4] sm:$0xf]
    %v156 = vld [vmem:[#allocation5 + $0x1b8] sm:$0xf]
    %v157 = vld [vmem:[#allocation5 + $0x1bc] sm:$0xf]
    %v158 = vld [vmem:[#allocation5 + $0x1c0] sm:$0xf]
    %v159 = vld [vmem:[#allocation5 + $0x1c4] sm:$0xf]
    %v160 = vld [vmem:[#allocation5 + $0x1c8] sm:$0xf]
    %v161 = vld [vmem:[#allocation5 + $0x1cc] sm:$0xf]
    %v162 = vld [vmem:[#allocation5 + $0x1d0] sm:$0xf]
    %v163 = vld [vmem:[#allocation5 + $0x1d4] sm:$0xf]
    %v164 = vld [vmem:[#allocation5 + $0x1d8] sm:$0xf]
    %v165 = vld [vmem:[#allocation5 + $0x1dc] sm:$0xf]
    %v166 = vld [vmem:[#allocation5 + $0x1e0] sm:$0xf]
    %v167 = vld [vmem:[#allocation5 + $0x1e4] sm:$0xf]
    %v168 = vld [vmem:[#allocation5 + $0x1e8] sm:$0xf]
    %v169 = vld [vmem:[#allocation5 + $0x1ec] sm:$0xf]
    %v170 = vld [vmem:[#allocation5 + $0x1f0] sm:$0xf]
    %v171 = vld [vmem:[#allocation5 + $0x1f4] sm:$0xf]
    %v172 = vld [vmem:[#allocation5 + $0x1f8] sm:$0xf]
    %v173 = vld [vmem:[#allocation5 + $0x1fc] sm:$0xf]
    %v174 = vld [vmem:[%s2] sm:$0x1]
    %v176 = vperm.slane %v174, 0
    %179 = vst [vmem:[#allocation1] ss:$9 sm:$0xff] %v45
    %v180 = vld [vmem:[#allocation1] sm:$0xff]
    %v181 = vld [vmem:[#allocation1 + $0x9] sm:$0xff]
    %v182 = vld [vmem:[#allocation1 + $0x12] sm:$0xff]
    %v183 = vld [vmem:[#allocation1 + $0x1b] sm:$0xff]
    %v184 = vld [vmem:[#allocation1 + $0x24] sm:$0xff]
    %v185 = vld [vmem:[#allocation1 + $0x2d] sm:$0xff]
    %v186 = vld [vmem:[#allocation1 + $0x36] sm:$0xff]
    %v187 = vld [vmem:[#allocation1 + $0x3f] sm:$0xff]
    %v324 = vunpack.c.l.b16 %v46
    %v325 = vunpack.c.l.b16 %v47
    %v326 = vunpack.c.l.b16 %v48
    %v327 = vunpack.c.l.b16 %v49
    %v328 = vunpack.c.l.b16 %v50
    %v329 = vunpack.c.l.b16 %v51
    %v330 = vunpack.c.l.b16 %v52
    %v331 = vunpack.c.l.b16 %v53
    %v332 = vunpack.c.l.b16 %v54
    %v333 = vunpack.c.l.b16 %v55
    %v334 = vunpack.c.l.b16 %v56
    %v335 = vunpack.c.l.b16 %v57
    %v336 = vunpack.c.l.b16 %v58
    %v337 = vunpack.c.l.b16 %v59
    %v338 = vunpack.c.l.b16 %v60
    %v339 = vunpack.c.l.b16 %v61
    %v340 = vunpack.c.l.b16 %v62
    %v341 = vunpack.c.l.b16 %v63
    %v342 = vunpack.c.l.b16 %v64
    %v343 = vunpack.c.l.b16 %v65
    %v344 = vunpack.c.l.b16 %v66
    %v345 = vunpack.c.l.b16 %v67
    %v346 = vunpack.c.l.b16 %v68
    %v347 = vunpack.c.l.b16 %v69
    %v348 = vunpack.c.l.b16 %v70
    %v349 = vunpack.c.l.b16 %v71
    %v350 = vunpack.c.l.b16 %v72
    %v351 = vunpack.c.l.b16 %v73
    %v352 = vunpack.c.l.b16 %v74
    %v353 = vunpack.c.l.b16 %v75
    %v354 = vunpack.c.l.b16 %v76
    %v355 = vunpack.c.l.b16 %v77
    %v356 = vunpack.c.l.b16 %v78
    %v357 = vunpack.c.l.b16 %v79
    %v358 = vunpack.c.l.b16 %v80
    %v359 = vunpack.c.l.b16 %v81
    %v360 = vunpack.c.l.b16 %v82
    %v361 = vunpack.c.l.b16 %v83
    %v362 = vunpack.c.l.b16 %v84
    %v363 = vunpack.c.l.b16 %v85
    %v364 = vunpack.c.l.b16 %v86
    %v365 = vunpack.c.l.b16 %v87
    %v366 = vunpack.c.l.b16 %v88
    %v367 = vunpack.c.l.b16 %v89
    %v368 = vunpack.c.l.b16 %v90
    %v369 = vunpack.c.l.b16 %v91
    %v370 = vunpack.c.l.b16 %v92
    %v371 = vunpack.c.l.b16 %v93
    %v372 = vunpack.c.l.b16 %v94
    %v373 = vunpack.c.l.b16 %v95
    %v374 = vunpack.c.l.b16 %v96
    %v375 = vunpack.c.l.b16 %v97
    %v376 = vunpack.c.l.b16 %v98
    %v377 = vunpack.c.l.b16 %v99
    %v378 = vunpack.c.l.b16 %v100
    %v379 = vunpack.c.l.b16 %v101
    %v380 = vunpack.c.l.b16 %v102
    %v381 = vunpack.c.l.b16 %v103
    %v382 = vunpack.c.l.b16 %v104
    %v383 = vunpack.c.l.b16 %v105
    %v384 = vunpack.c.l.b16 %v106
    %v385 = vunpack.c.l.b16 %v107
    %v386 = vunpack.c.l.b16 %v108
    %v387 = vunpack.c.l.b16 %v109
    %v388 = vunpack.c.l.b16 %v110
    %v389 = vunpack.c.l.b16 %v111
    %v390 = vunpack.c.l.b16 %v112
    %v391 = vunpack.c.l.b16 %v113
    %v392 = vunpack.c.l.b16 %v114
    %v393 = vunpack.c.l.b16 %v115
    %v394 = vunpack.c.l.b16 %v116
    %v395 = vunpack.c.l.b16 %v117
    %v396 = vunpack.c.l.b16 %v118
    %v397 = vunpack.c.l.b16 %v119
    %v398 = vunpack.c.l.b16 %v120
    %v399 = vunpack.c.l.b16 %v121
    %v400 = vunpack.c.l.b16 %v122
    %v401 = vunpack.c.l.b16 %v123
    %v402 = vunpack.c.l.b16 %v124
    %v403 = vunpack.c.l.b16 %v125
    %v404 = vunpack.c.l.b16 %v126
    %v405 = vunpack.c.l.b16 %v127
    %v406 = vunpack.c.l.b16 %v128
    %v407 = vunpack.c.l.b16 %v129
    %v408 = vunpack.c.l.b16 %v130
    %v409 = vunpack.c.l.b16 %v131
    %v410 = vunpack.c.l.b16 %v132
    %v411 = vunpack.c.l.b16 %v133
    %v412 = vunpack.c.l.b16 %v134
    %v413 = vunpack.c.l.b16 %v135
    %v414 = vunpack.c.l.b16 %v136
    %v415 = vunpack.c.l.b16 %v137
    %v416 = vunpack.c.l.b16 %v138
    %v417 = vunpack.c.l.b16 %v139
    %v418 = vunpack.c.l.b16 %v140
    %v419 = vunpack.c.l.b16 %v141
    %v420 = vunpack.c.l.b16 %v142
    %v421 = vunpack.c.l.b16 %v143
    %v422 = vunpack.c.l.b16 %v144
    %v423 = vunpack.c.l.b16 %v145
    %v424 = vunpack.c.l.b16 %v146
    %v425 = vunpack.c.l.b16 %v147
    %v426 = vunpack.c.l.b16 %v148
    %v427 = vunpack.c.l.b16 %v149
    %v428 = vunpack.c.l.b16 %v150
    %v429 = vunpack.c.l.b16 %v151
    %v430 = vunpack.c.l.b16 %v152
    %v431 = vunpack.c.l.b16 %v153
    %v432 = vunpack.c.l.b16 %v154
    %v433 = vunpack.c.l.b16 %v155
    %v434 = vunpack.c.l.b16 %v156
    %v435 = vunpack.c.l.b16 %v157
    %v436 = vunpack.c.l.b16 %v158
    %v437 = vunpack.c.l.b16 %v159
    %v438 = vunpack.c.l.b16 %v160
    %v439 = vunpack.c.l.b16 %v161
    %v440 = vunpack.c.l.b16 %v162
    %v441 = vunpack.c.l.b16 %v163
    %v442 = vunpack.c.l.b16 %v164
    %v443 = vunpack.c.l.b16 %v165
    %v444 = vunpack.c.l.b16 %v166
    %v445 = vunpack.c.l.b16 %v167
    %v446 = vunpack.c.l.b16 %v168
    %v447 = vunpack.c.l.b16 %v169
    %v448 = vunpack.c.l.b16 %v170
    %v449 = vunpack.c.l.b16 %v171
    %v450 = vunpack.c.l.b16 %v172
    %v451 = vunpack.c.l.b16 %v173
    %v452 = vpack.c.b16 %v325, %v324
    %v453 = vpack.c.b16 %v327, %v326
    %v454 = vpack.c.b16 %v329, %v328
    %v455 = vpack.c.b16 %v331, %v330
    %v456 = vpack.c.b16 %v333, %v332
    %v457 = vpack.c.b16 %v335, %v334
    %v458 = vpack.c.b16 %v337, %v336
    %v459 = vpack.c.b16 %v339, %v338
    %v460 = vpack.c.b16 %v341, %v340
    %v461 = vpack.c.b16 %v343, %v342
    %v462 = vpack.c.b16 %v345, %v344
    %v463 = vpack.c.b16 %v347, %v346
    %v464 = vpack.c.b16 %v349, %v348
    %v465 = vpack.c.b16 %v351, %v350
    %v466 = vpack.c.b16 %v353, %v352
    %v467 = vpack.c.b16 %v355, %v354
    %v468 = vpack.c.b16 %v357, %v356
    %v469 = vpack.c.b16 %v359, %v358
    %v470 = vpack.c.b16 %v361, %v360
    %v471 = vpack.c.b16 %v363, %v362
    %v472 = vpack.c.b16 %v365, %v364
    %v473 = vpack.c.b16 %v367, %v366
    %v474 = vpack.c.b16 %v369, %v368
    %v475 = vpack.c.b16 %v371, %v370
    %v476 = vpack.c.b16 %v373, %v372
    %v477 = vpack.c.b16 %v375, %v374
    %v478 = vpack.c.b16 %v377, %v376
    %v479 = vpack.c.b16 %v379, %v378
    %v480 = vpack.c.b16 %v381, %v380
    %v481 = vpack.c.b16 %v383, %v382
    %v482 = vpack.c.b16 %v385, %v384
    %v483 = vpack.c.b16 %v387, %v386
    %v484 = vpack.c.b16 %v389, %v388
    %v485 = vpack.c.b16 %v391, %v390
    %v486 = vpack.c.b16 %v393, %v392
    %v487 = vpack.c.b16 %v395, %v394
    %v488 = vpack.c.b16 %v397, %v396
    %v489 = vpack.c.b16 %v399, %v398
    %v490 = vpack.c.b16 %v401, %v400
    %v491 = vpack.c.b16 %v403, %v402
    %v492 = vpack.c.b16 %v405, %v404
    %v493 = vpack.c.b16 %v407, %v406
    %v494 = vpack.c.b16 %v409, %v408
    %v495 = vpack.c.b16 %v411, %v410
    %v496 = vpack.c.b16 %v413, %v412
    %v497 = vpack.c.b16 %v415, %v414
    %v498 = vpack.c.b16 %v417, %v416
    %v499 = vpack.c.b16 %v419, %v418
    %v500 = vpack.c.b16 %v421, %v420
    %v501 = vpack.c.b16 %v423, %v422
    %v502 = vpack.c.b16 %v425, %v424
    %v503 = vpack.c.b16 %v427, %v426
    %v504 = vpack.c.b16 %v429, %v428
    %v505 = vpack.c.b16 %v431, %v430
    %v506 = vpack.c.b16 %v433, %v432
    %v507 = vpack.c.b16 %v435, %v434
    %v508 = vpack.c.b16 %v437, %v436
    %v509 = vpack.c.b16 %v439, %v438
    %v510 = vpack.c.b16 %v441, %v440
    %v511 = vpack.c.b16 %v443, %v442
    %v512 = vpack.c.b16 %v445, %v444
    %v513 = vpack.c.b16 %v447, %v446
    %v514 = vpack.c.b16 %v449, %v448
    %v515 = vpack.c.b16 %v451, %v450
    %580 = vmatpush.bf16.msra.mxu0 %v459
    %581 = vmatpush.bf16.msra.mxu0 %v458
    %582 = vmatpush.bf16.msra.mxu0 %v457
    %583 = vmatpush.bf16.msra.mxu0 %v456
    %584 = vmatpush.bf16.msra.mxu0 %v455
    %585 = vmatpush.bf16.msra.mxu0 %v454
    %586 = vmatpush.bf16.msra.mxu0 %v453
    %587 = vmatpush.bf16.msra.mxu0 %v452
    %588 = vmatmul.bf16.gmra.mxu0 %v180
    %v589 = vpop.f32.mrf.mxu0
    %v590 = vadd.f32 %v176, %v589
    %v591 = vpop.f32.mrf.mxu0
    %592 = vdwg.mxu0
    %593 = vmatpush.bf16.msra.mxu0 %v467
    %594 = vmatpush.bf16.msra.mxu0 %v466
    %595 = vmatpush.bf16.msra.mxu0 %v465
    %596 = vmatpush.bf16.msra.mxu0 %v464
    %597 = vmatpush.bf16.msra.mxu0 %v463
    %598 = vmatpush.bf16.msra.mxu0 %v462
    %599 = vmatpush.bf16.msra.mxu0 %v461
    %600 = vmatpush.bf16.msra.mxu0 %v460
    %601 = vmatmul.bf16.gmra.mxu0 %v181
    %v602 = vpop.f32.mrf.mxu0
    %v603 = vadd.f32 %v590, %v602
    %v604 = vpop.f32.mrf.mxu0
    %605 = vdwg.mxu0
    %606 = vmatpush.bf16.msra.mxu0 %v475
    %607 = vmatpush.bf16.msra.mxu0 %v474
    %608 = vmatpush.bf16.msra.mxu0 %v473
    %609 = vmatpush.bf16.msra.mxu0 %v472
    %610 = vmatpush.bf16.msra.mxu0 %v471
    %611 = vmatpush.bf16.msra.mxu0 %v470
    %612 = vmatpush.bf16.msra.mxu0 %v469
    %613 = vmatpush.bf16.msra.mxu0 %v468
    %614 = vmatmul.bf16.gmra.mxu0 %v182
    %v615 = vpop.f32.mrf.mxu0
    %v616 = vadd.f32 %v603, %v615
    %v617 = vpop.f32.mrf.mxu0
    %618 = vdwg.mxu0
    %619 = vmatpush.bf16.msra.mxu0 %v483
    %620 = vmatpush.bf16.msra.mxu0 %v482
    %621 = vmatpush.bf16.msra.mxu0 %v481
    %622 = vmatpush.bf16.msra.mxu0 %v480
    %623 = vmatpush.bf16.msra.mxu0 %v479
    %624 = vmatpush.bf16.msra.mxu0 %v478
    %625 = vmatpush.bf16.msra.mxu0 %v477
    %626 = vmatpush.bf16.msra.mxu0 %v476
    %627 = vmatmul.bf16.gmra.mxu0 %v183
    %v628 = vpop.f32.mrf.mxu0
    %v629 = vadd.f32 %v616, %v628
    %v630 = vpop.f32.mrf.mxu0
    %631 = vdwg.mxu0
    %632 = vmatpush.bf16.msra.mxu0 %v491
    %633 = vmatpush.bf16.msra.mxu0 %v490
    %634 = vmatpush.bf16.msra.mxu0 %v489
    %635 = vmatpush.bf16.msra.mxu0 %v488
    %636 = vmatpush.bf16.msra.mxu0 %v487
    %637 = vmatpush.bf16.msra.mxu0 %v486
    %638 = vmatpush.bf16.msra.mxu0 %v485
    %639 = vmatpush.bf16.msra.mxu0 %v484
    %640 = vmatmul.bf16.gmra.mxu0 %v184
    %v641 = vpop.f32.mrf.mxu0
    %v642 = vadd.f32 %v629, %v641
    %v643 = vpop.f32.mrf.mxu0
    %644 = vdwg.mxu0
    %645 = vmatpush.bf16.msra.mxu0 %v499
    %646 = vmatpush.bf16.msra.mxu0 %v498
    %647 = vmatpush.bf16.msra.mxu0 %v497
    %648 = vmatpush.bf16.msra.mxu0 %v496
    %649 = vmatpush.bf16.msra.mxu0 %v495
    %650 = vmatpush.bf16.msra.mxu0 %v494
    %651 = vmatpush.bf16.msra.mxu0 %v493
    %652 = vmatpush.bf16.msra.mxu0 %v492
    %653 = vmatmul.bf16.gmra.mxu0 %v185
    %v654 = vpop.f32.mrf.mxu0
    %v655 = vadd.f32 %v642, %v654
    %v656 = vpop.f32.mrf.mxu0
    %657 = vdwg.mxu0
    %658 = vmatpush.bf16.msra.mxu0 %v507
    %659 = vmatpush.bf16.msra.mxu0 %v506
    %660 = vmatpush.bf16.msra.mxu0 %v505
    %661 = vmatpush.bf16.msra.mxu0 %v504
    %662 = vmatpush.bf16.msra.mxu0 %v503
    %663 = vmatpush.bf16.msra.mxu0 %v502
    %664 = vmatpush.bf16.msra.mxu0 %v501
    %665 = vmatpush.bf16.msra.mxu0 %v500
    %666 = vmatmul.bf16.gmra.mxu0 %v186
    %v667 = vpop.f32.mrf.mxu0
    %v668 = vadd.f32 %v655, %v667
    %v669 = vpop.f32.mrf.mxu0
    %670 = vdwg.mxu0
    %671 = vmatpush.bf16.msra.mxu0 %v515
    %672 = vmatpush.bf16.msra.mxu0 %v514
    %673 = vmatpush.bf16.msra.mxu0 %v513
    %674 = vmatpush.bf16.msra.mxu0 %v512
    %675 = vmatpush.bf16.msra.mxu0 %v511
    %676 = vmatpush.bf16.msra.mxu0 %v510
    %677 = vmatpush.bf16.msra.mxu0 %v509
    %678 = vmatpush.bf16.msra.mxu0 %v508
    %679 = vmatmul.bf16.gmra.mxu0 %v187
    %v680 = vpop.f32.mrf.mxu0
    %v681 = vadd.f32 %v668, %v680
    %v682 = vpop.f32.mrf.mxu0
    %683 = vdwg.mxu0
    %684 = vst [vmem:[#allocation7] sm:$0x3] %v681
    // Predicated region
    $region22: #{tpu_custom_call.1} parent=1 // pred_check
      _
    $region23: #{tpu_custom_call.1} parent=1 // pred_check_branch
      %686 = sbr.rel (0) target = $region25
    $region24: #{tpu_custom_call.1} parent=1 // pred_region
      %688 = vsyncadd [#allocation4], 0
      %s690 = sshll.u32 [#allocation7], 4
      %s691 = int_to_ptr.vmem [resolvable:$true] %s690
      %s692 = sshll.u32 %s3, 4
      %s693 = int_to_ptr.hbm [resolvable:$true] %s692
      %695 = dma.vmem_to_hbm [thread:$0]  %s691, 32, %s693, [#allocation4]
    $region25: #{tpu_custom_call.1} parent=1 // pred_fallthru
      _
    // Predicated region
    $region26: #{tpu_custom_call.1} parent=1 // pred_check
      _
    $region27: #{tpu_custom_call.1} parent=1 // pred_check_branch
      %697 = sbr.rel (0) target = $region29
    $region28: #{tpu_custom_call.1} parent=1 // pred_region
      %699 = dma.done [#allocation4], 32
    $region29: #{tpu_custom_call.1} parent=1 // pred_fallthru
      _
    %700 = vsyncpa [#allocation3], 1
    %701 = vsyncpa [#allocation6], 1
    %702 = vsyncpa [#allocation4], 1

</llo_original>
